<compile_context>
chip_gen: v7x
topology: tpu7x:2x2x1
jax: 0.10.0
libtpu: 0.0.40
codegen_flags: <defaults>
</compile_context>

<pallas_src>
import math

import jax
import jax.numpy as jnp
from jax.experimental import pallas as pl
from jax.experimental.pallas import tpu as pltpu

_LANE = 128


def _diag_linear_kernel(x_ref, db_ref, o_ref):
    # Pure VPU elementwise: per-lane scale + bias.  db row 0 = diag(W),
    # row 1 = bias; the (1, C) rows sublane-broadcast across the (TR, C) tile.
    db = db_ref[...]
    o_ref[...] = (x_ref[...] * db[0:1, :] + db[1:2, :]).astype(o_ref.dtype)


def _is_v7x():
    """Best-effort detection of a v7x-class chip (2 TCs, 3.2 TB/s HBM)."""
    try:
        kinds = " ".join(d.device_kind.lower() for d in jax.devices())
        return ("v7" in kinds) or ("tpu7" in kinds)
    except Exception:  # pragma: no cover - never fail the kernel on detection
        return False


def _row_tile(rows, cols, itemsize, target_bytes):
    """Byte-budgeted row tile, rounded to the packing-aware sublane multiple."""
    sub = max(8, 32 // max(1, itemsize))          # 8 (f32) / 16 (bf16) / 32 (8-bit)
    tr = (target_bytes // max(1, cols * itemsize)) // sub * sub
    tr = max(sub, tr)
    tr = min(tr, -(-rows // sub) * sub)           # never larger than (padded) extent
    if tr >= rows:
        return rows                               # single full-extent block
    return tr


def diag_linear(x, weight, bias=None, *, target_tile_bytes=None,
                min_pallas_elements=65536):
    """DiagLinear forward.  x: (..., N), weight: (N, N), bias: (N,) -> (..., N)."""
    n = x.shape[-1]
    assert weight.shape == (n, n), "DiagLinear requires out_features == in_features"

    orig_shape = x.shape
    x2 = x.reshape(-1, n)
    m = x2.shape[0]

    # Effective weight is just the diagonal -> ship N floats, not N*N.
    d = jnp.diagonal(weight).astype(x.dtype)
    b = jnp.zeros((n,), dtype=x.dtype) if bias is None else bias.astype(x.dtype)

    # Tiny problems (the real HEP step shapes): let XLA fuse a plain
    # elementwise op; the custom-call launch + DMA setup would dominate.
    if m * n < min_pallas_elements:
        return (x2 * d[None, :] + b[None, :]).astype(x.dtype).reshape(orig_shape)

    itemsize = jnp.dtype(x.dtype).itemsize
    is_v7 = _is_v7x()
    if target_tile_bytes is None:
        # ~2 MiB tiles reach ~85% of HBM roofline on v5e/v6e; v7x's faster HBM
        # wants bigger tiles to amortize the ~0.35 us per-grid-step overhead.
        target_tile_bytes = (4 << 20) if is_v7 else (2 << 20)

    # --- Lane-dense packing / padding so every store is a full-width vst ----
    if n % _LANE == 0:
        x_work, cols = x2, n
        dd, bb = d, b
        unpack = lambda o: o
    elif _LANE % n == 0:
        # Repack (M, N) -> (M*N/128, 128); each packed row holds 128//N batch
        # rows, so diag/bias tile with period N.  Pad rows so the reshape works.
        rep = _LANE // n
        m_pad = -(-m // rep) * rep
        x2p = jnp.pad(x2, ((0, m_pad - m), (0, 0))) if m_pad != m else x2
        x_work = x2p.reshape(m_pad * n // _LANE, _LANE)
        cols = _LANE
        dd, bb = jnp.tile(d, rep), jnp.tile(b, rep)
        unpack = lambda o: o.reshape(m_pad, n)[:m]
    else:
        # Awkward feature width: pad to the next multiple of 128 (diag/bias
        # pad with zeros so the padded columns are exactly zero) and slice.
        n_pad = -(-n // _LANE) * _LANE
        x_work = jnp.pad(x2, ((0, 0), (0, n_pad - n)))
        cols = n_pad
        dd = jnp.pad(d, (0, n_pad - n))
        bb = jnp.pad(b, (0, n_pad - n))
        unpack = lambda o: o[:, :n]

    rows = x_work.shape[0]
    db = jnp.stack([dd, bb], axis=0)              # (2, cols): diag row, bias row

    tr = _row_tile(rows, cols, itemsize, target_tile_bytes)
    grid = (pl.cdiv(rows, tr),)                   # ragged last block is fine

    cost = pl.CostEstimate(
        flops=2 * m * n,
        transcendentals=0,
        bytes_accessed=itemsize * (2 * m * n) + itemsize * 2 * n,
    )

    # v7x has 2 TensorCores per chip: shard the row loop across them.  Other
    # generations (1 TC) keep plain "parallel".
    sem = getattr(pltpu, "CORE_PARALLEL", "parallel") if is_v7 else "parallel"

    out = pl.pallas_call(
        _diag_linear_kernel,
        out_shape=jax.ShapeDtypeStruct((rows, cols), x.dtype),
        grid_spec=pltpu.PrefetchScalarGridSpec(
            num_scalar_prefetch=0,
            grid=grid,
            in_specs=[
                pl.BlockSpec((tr, cols), lambda i: (i, 0)),   # x block (pipelined)
                pl.BlockSpec((2, cols), lambda i: (0, 0)),    # diag+bias, resident
            ],
            out_specs=pl.BlockSpec((tr, cols), lambda i: (i, 0)),
        ),
        compiler_params=pltpu.CompilerParams(
            dimension_semantics=(sem,),
            # 2 inputs + output, double-buffered, at <=4 MiB tiles fits easily;
            # 32 MiB is safe on every generation (v7x physical = 64 MiB/TC).
            vmem_limit_bytes=32 * 1024 * 1024,
        ),
        cost_estimate=cost,
    )(x_work, db)

    return unpack(out).reshape(orig_shape)


# TODO(synk): the rest of HEP (GRU-D-style recurrence, BatchNorm1d, attention,
# output head) is ordinary dense/elementwise work best left to XLA; only the
# custom DiagLinear layer is implemented as a Pallas kernel here.


if __name__ == "__main__":
    key = jax.random.PRNGKey(0)
    kw, kb, kx, k2w, k2b, k2x, k3w, k3b, k3x = jax.random.split(key, 9)

    # ---- Test 1: exact HEP call pattern: gamma_x_l(delta), delta (B, 1, N) ----
    batch, n = 8, 32
    stdv = 1.0 / math.sqrt(n)                   # mirrors reset_parameters()
    weight = jax.random.uniform(kw, (n, n), minval=-stdv, maxval=stdv,
                                dtype=jnp.float32)
    bias = jax.random.uniform(kb, (n,), minval=-stdv, maxval=stdv,
                              dtype=jnp.float32)
    delta = jax.random.normal(kx, (batch, 1, n), dtype=jnp.float32)

    w_eff = jnp.eye(n, dtype=jnp.float32) * weight          # diag.mul(weight)
    ref1 = jnp.einsum("bti,oi->bto", delta, w_eff) + bias    # F.linear

    out_tiny = jax.block_until_ready(diag_linear(delta, weight, bias))
    out_pallas = jax.block_until_ready(
        diag_linear(delta, weight, bias, min_pallas_elements=0))  # force kernel
    assert out_tiny.shape == (batch, 1, n)
    assert jnp.allclose(out_tiny, ref1, atol=1e-5, rtol=1e-5)
    assert jnp.allclose(out_pallas, ref1, atol=1e-5, rtol=1e-5)

    # ---- Test 2: lane-aligned N (multiple of 128), multi-step ragged grid ----
    m2, n2 = 1000, 128
    w2 = jax.random.uniform(k2w, (n2, n2), minval=-0.1, maxval=0.1,
                            dtype=jnp.float32)
    b2 = jax.random.uniform(k2b, (n2,), minval=-0.1, maxval=0.1,
                            dtype=jnp.float32)
    x2 = jax.random.normal(k2x, (m2, n2), dtype=jnp.float32)
    ref2 = x2 * jnp.diagonal(w2)[None, :] + b2[None, :]
    out2 = jax.block_until_ready(
        diag_linear(x2, w2, b2, target_tile_bytes=128 * 1024))  # grid>1, ragged tail
    assert jnp.allclose(out2, ref2, atol=1e-5, rtol=1e-5)

    # bf16 end-to-end through the same kernel (packing-aware sublane tiling).
    xb = x2.astype(jnp.bfloat16)
    refb = (xb * jnp.diagonal(w2).astype(jnp.bfloat16)[None, :]
            + b2.astype(jnp.bfloat16)[None, :])
    outb = jax.block_until_ready(diag_linear(xb, w2, b2))
    assert outb.dtype == jnp.bfloat16
    assert jnp.allclose(outb.astype(jnp.float32), refb.astype(jnp.float32),
                        atol=2e-2, rtol=2e-2)

    # ---- Test 3: N neither divisor nor multiple of 128 -> feature padding ----
    m3, n3 = 768, 96
    w3 = jax.random.uniform(k3w, (n3, n3), minval=-0.1, maxval=0.1,
                            dtype=jnp.float32)
    b3 = jax.random.uniform(k3b, (n3,), minval=-0.1, maxval=0.1,
                            dtype=jnp.float32)
    x3 = jax.random.normal(k3x, (m3, n3), dtype=jnp.float32)
    ref3 = x3 * jnp.diagonal(w3)[None, :] + b3[None, :]
    out3 = jax.block_until_ready(diag_linear(x3, w3, b3))
    assert out3.shape == (m3, n3)
    assert jnp.allclose(out3, ref3, atol=1e-5, rtol=1e-5)

    print("KERNEL_OK")
</pallas_src>

<mosaic_0001>
module attributes {stable_mosaic.version = 11 : i64} {
  func.func @_diag_linear_kernel(%arg0: i32, %arg1: memref<2x128xf32, #tpu.memory_space<vmem>>, %arg2: memref<2x128xf32, #tpu.memory_space<vmem>>, %arg3: memref<2x128xf32, #tpu.memory_space<vmem>>) attributes {dimension_semantics = [#tpu.dimension_semantics<parallel>], iteration_bounds = array<i64: 1>, scalar_prefetch = 0 : i64, scratch_operands = 0 : i64, tpu.core_type = #tpu.core_type<tc>, window_params = [{transform_indices = @transform_0, window_bounds = array<i64: 2, 128>}, {pipeline_mode = #tpu.pipeline_mode<synchronous>, transform_indices = @transform_1, window_bounds = array<i64: 2, 128>}, {transform_indices = @transform_2, window_bounds = array<i64: 2, 128>}]} {
    %c0 = arith.constant 0 : index
    %c0_0 = arith.constant 0 : index
    %0 = vector.load %arg2[%c0, %c0_0] : memref<2x128xf32, #tpu.memory_space<vmem>>, vector<2x128xf32>
    %c0_1 = arith.constant 0 : index
    %c0_2 = arith.constant 0 : index
    %1 = vector.load %arg1[%c0_1, %c0_2] : memref<2x128xf32, #tpu.memory_space<vmem>>, vector<2x128xf32>
    %2 = vector.extract_strided_slice %0 {offsets = [0, 0], sizes = [1, 128], strides = [1, 1]} : vector<2x128xf32> to vector<1x128xf32>
    %3 = vector.broadcast %2 : vector<1x128xf32> to vector<2x128xf32>
    %4 = arith.mulf %1, %3 : vector<2x128xf32>
    %5 = vector.extract_strided_slice %0 {offsets = [1, 0], sizes = [1, 128], strides = [1, 1]} : vector<2x128xf32> to vector<1x128xf32>
    %6 = vector.broadcast %5 : vector<1x128xf32> to vector<2x128xf32>
    %7 = arith.addf %4, %6 : vector<2x128xf32>
    %c0_3 = arith.constant 0 : index
    %c0_4 = arith.constant 0 : index
    %8 = vector.load %arg3[%c0_3, %c0_4] : memref<2x128xf32, #tpu.memory_space<vmem>>, vector<2x128xf32>
    tpu.vector_store %arg3[%c0_3, %c0_4], %7 {strides = array<i32>} : memref<2x128xf32, #tpu.memory_space<vmem>>, vector<2x128xf32>,
    return
  }
  func.func @transform_0(%arg0: i32) -> (i32, i32) {
    %c0_i32 = arith.constant 0 : i32
    %c0_i32_0 = arith.constant 0 : i32
    return %arg0, %c0_i32 : i32, i32
  }
  func.func @transform_1(%arg0: i32) -> (i32, i32) {
    %c0_i32 = arith.constant 0 : i32
    %c0_i32_0 = arith.constant 0 : i32
    %c0_i32_1 = arith.constant 0 : i32
    return %c0_i32, %c0_i32_0 : i32, i32
  }
  func.func @transform_2(%arg0: i32) -> (i32, i32) {
    %c0_i32 = arith.constant 0 : i32
    %c0_i32_0 = arith.constant 0 : i32
    return %arg0, %c0_i32 : i32, i32
  }
}

</mosaic_0001>

<llo_original>
// kernel: tpu_custom_call.1
$region0: #{tpu_custom_call.1}
  #allocation0 [shape = 'u32[]', space=smem, size = 0x4, offset = 0x4, fixed_abs, tag = 'smem constant byte address 0x4 - core index']
  #allocation1 [shape = 'u32[144,128]{1,0:T(1,128)}', space=vmem, size = 0x12000, scoped, tag = 'internal scratch']
  %s0 = inlined_call_operand.hbm [shape: f32[2,128], index: 0, kind: input, shape index: {}]
  %s1 = inlined_call_operand.vmem [shape: f32[2,128], index: 1, kind: input, shape index: {}]
  %s2 = inlined_call_operand.hbm [shape: f32[2,128], index: 2, kind: output, shape index: {}]
  %s3 = sld [smem:[#allocation0]]
  $region22: #{tpu_custom_call.1} parent=0
    _
  %s5 = ssub.s32 1, %s3
  %s6 = scalar_select 0, %s5, %s3
  $region1: #{tpu_custom_call.1} parent=0
    #allocation2 [shape = 'u8[1024]{0}', space=vmem, size = 0x400, scoped, tag = 'input window, operand 0, single buffered']
    #allocation3 [shape = 's32[1]{0}', space=sflag, size = 0x4, scoped, tag = 'scoped memory for tpu_custom_call.1']
    #allocation4 [shape = 's32[1]{0}', space=sflag, size = 0x4, scoped, tag = 'scoped memory for tpu_custom_call.1']
    #allocation5 [shape = 'u8[1024]{0}', space=vmem, size = 0x400, scoped, tag = 'output window, operand 0, single buffered']
    %7 = vsyncpa [#allocation3], 0
    %8 = vsyncpa [#allocation4], 0
    // Predicated region
    $region2: #{tpu_custom_call.1} parent=1 // pred_check
      _
    $region3: #{tpu_custom_call.1} parent=1 // pred_check_branch
      %10 = sbr.rel (0) target = $region5
    $region4: #{tpu_custom_call.1} parent=1 // pred_region
      %s12 = ssub.s32 32, 32
      %13 = vsyncadd [#allocation3], %s12
      %s15 = sshll.u32 [#allocation2], 4
      %s16 = int_to_ptr.vmem [resolvable:$true] %s15
      %18 = dma.hbm_to_vmem [thread:$0]  %s0, 32, %s16, [#allocation3]
    $region5: #{tpu_custom_call.1} parent=1 // pred_fallthru
      _
    // Predicated region
    $region6: #{tpu_custom_call.1} parent=1 // pred_check
      _
    $region7: #{tpu_custom_call.1} parent=1 // pred_check_branch
      %20 = sbr.rel (0) target = $region9
    $region8: #{tpu_custom_call.1} parent=1 // pred_region
      _
    $region9: #{tpu_custom_call.1} parent=1 // pred_fallthru
      _
    // Predicated region
    $region10: #{tpu_custom_call.1} parent=1 // pred_check
      _
    $region11: #{tpu_custom_call.1} parent=1 // pred_check_branch
      %22 = sbr.rel (0) target = $region13
    $region12: #{tpu_custom_call.1} parent=1 // pred_region
      %23 = dma.done [#allocation3], 32
    $region13: #{tpu_custom_call.1} parent=1 // pred_fallthru
      _
    %v24 = vld [vmem:[%s1] sm:$0x3]
    %v25 = vld [vmem:[#allocation2] sm:$0x3]
    %v26 = vlaneseq
    %v27 = vshrl.u32 %v26, 7
    %v28 = vsub.s32 0, %v27
    %v29 = vrot.slane %v24, %v28
    %v30 = vmul.f32 %v25, %v29
    %v31 = vlaneseq
    %v32 = vshrl.u32 %v31, 7
    %v33 = vsub.s32 1, %v32
    %v34 = vrot.slane %v24, %v33
    %v35 = vadd.f32 %v30, %v34
    %36 = vst [vmem:[#allocation5] sm:$0x3] %v35
    // Predicated region
    $region14: #{tpu_custom_call.1} parent=1 // pred_check
      _
    $region15: #{tpu_custom_call.1} parent=1 // pred_check_branch
      %38 = sbr.rel (0) target = $region17
    $region16: #{tpu_custom_call.1} parent=1 // pred_region
      %s40 = ssub.s32 32, 32
      %41 = vsyncadd [#allocation4], %s40
      %s43 = sshll.u32 [#allocation5], 4
      %s44 = int_to_ptr.vmem [resolvable:$true] %s43
      %46 = dma.vmem_to_hbm [thread:$0]  %s44, 32, %s2, [#allocation4]
    $region17: #{tpu_custom_call.1} parent=1 // pred_fallthru
      _
    // Predicated region
    $region18: #{tpu_custom_call.1} parent=1 // pred_check
      _
    $region19: #{tpu_custom_call.1} parent=1 // pred_check_branch
      %48 = sbr.rel (0) target = $region21
    $region20: #{tpu_custom_call.1} parent=1 // pred_region
      %49 = dma.done [#allocation4], 32
    $region21: #{tpu_custom_call.1} parent=1 // pred_fallthru
      _
    %50 = vsyncpa [#allocation3], 1
    %51 = vsyncpa [#allocation4], 1

</llo_original>
